<compile_context>
chip_gen: v7x
topology: tpu7x:2x2x1
jax: 0.10.0
libtpu: 0.0.40
codegen_flags: <defaults>
</compile_context>

<pallas_src>
import functools

import jax
import jax.numpy as jnp
from jax.experimental import pallas as pl
from jax.experimental.pallas import tpu as pltpu


_HIDDEN = 32  # fixed by the module: nn.Linear(n_features, 32)


def _round_up(x, m):
    return ((x + m - 1) // m) * m


def _cdiv(a, b):
    return -(-a // b)


def _sparse_ffnn_kernel(x_ref, w1_ref, bw_ref, o_ref, *, a_valid, chunk_b):
    # x_ref : (TB, Ap, F) streamed features         (Ap = A rounded up to 8)
    # w1_ref: (F, H)      resident W1^T
    # bw_ref: (2, H)      resident [b1 ; w2] (f32)
    # o_ref : (TB, Ap)    lane-dense probabilities
    tb, ap, f = x_ref.shape
    h_dim = w1_ref.shape[1]

    # Resident operands, hoisted out of the chunk loop.
    w1 = w1_ref[...]          # (F, H)
    b1 = bw_ref[0:1, :]       # (1, H)
    w2 = bw_ref[1:2, :]       # (1, H)

    def process(r0, rows_b):
        # One chunk of `rows_b` batch rows starting at batch-row `r0`.
        xc = x_ref[pl.ds(r0, rows_b), :, :]                       # (rows_b, Ap, F)
        x2 = xc.reshape(rows_b * ap, f)                           # free: Ap % 8 == 0
        # linear1 + ReLU on the MXU (f32 accumulate; HIGHEST is free, kernel is HBM-bound).
        h = jnp.dot(x2, w1, preferred_element_type=jnp.float32,
                    precision=jax.lax.Precision.HIGHEST)          # (rows, H)
        h = jnp.maximum(h + b1, 0.0)
        # linear2 (H -> 1): VPU multiply + lane reduce (no N=1 MXU matvec).
        score = jnp.sum((h * w2).reshape(rows_b, ap, h_dim), axis=-1)   # (rows_b, Ap)
        # b2 is intentionally NOT added: softmax is shift-invariant, so it is an
        # exact no-op on the output.
        if a_valid < ap:
            lane = jax.lax.broadcasted_iota(jnp.int32, (rows_b, ap), 1)
            score = jnp.where(lane < a_valid, score, -jnp.inf)
        # Numerically-stable softmax over the (lane-axis) action dimension.
        m = jnp.max(score, axis=-1, keepdims=True)
        e = jnp.exp(score - m)
        denom = jnp.sum(e, axis=-1, keepdims=True)
        o_ref[pl.ds(r0, rows_b), :] = (
            e * pl.reciprocal(denom, approx=False)).astype(o_ref.dtype)

    n_full = tb // chunk_b
    rem = tb - n_full * chunk_b
    if n_full == 1 and rem == 0:
        process(0, chunk_b)                    # common case: single chunk, no loop
    else:
        if n_full > 0:
            def body(c, carry):
                process(c * chunk_b, chunk_b)
                return carry
            jax.lax.fori_loop(0, n_full, body, 0, unroll=(n_full <= 8))
        if rem > 0:
            process(n_full * chunk_b, rem)     # static tail chunk


def _default_vmem_limit_bytes():
    """Generation-aware scoped-VMEM limit: physical VMEM minus headroom for Mosaic
    internal scratch, clamped to [16 MiB, 104 MiB] (=> ~40 MiB on v7x's 64 MiB-per-TC
    parts, ~104 MiB on v5e/v6e's 128 MiB parts)."""
    phys = 64 << 20  # conservative fallback (v7x per-TensorCore VMEM)
    try:
        phys = int(pltpu.get_tpu_info().vmem_capacity_bytes)
    except Exception:  # non-TPU backend / API drift -> keep conservative fallback
        pass
    return int(min(max(phys - (24 << 20), 16 << 20), 104 << 20))


def _pick_tb(B, Ap, F, H, x_itemsize, vmem_limit_bytes, chunk_rows):
    """Largest batch tile whose *actual* VMEM footprint (lane-padded, double-buffered
    x block + output block + resident weights + bounded chunked-epilogue temporaries
    + reserve) fits the limit, capped so the batch grid has >= 2 steps."""
    f_lanes = _round_up(F, 128)
    h_lanes = _round_up(H, 128)
    resident = 2 * _round_up(F, 8) * h_lanes * x_itemsize        # W1^T (2 buffers)
    resident += 2 * 8 * h_lanes * 4                              # [b1; w2]
    rows = _round_up(max(chunk_rows, Ap), Ap)                    # flattened rows / chunk
    intermediates = 3 * rows * h_lanes * 4                       # h, h*w2, softmax temps
    reserve = 4 << 20                                            # Mosaic internal scratch
    budget = vmem_limit_bytes - resident - intermediates - reserve
    per_row = 2 * Ap * f_lanes * x_itemsize + 2 * Ap * 4         # x (2 bufs) + out (2 bufs)
    tb = max(1, budget // per_row)
    if B >= 2:
        # >= 2 grid steps: shards the batch across v7x's two TensorCores ("parallel"
        # axis) and keeps the input pipeline's prefetch/writeback overlap alive.
        tb = min(tb, _cdiv(B, 2))
    return int(max(1, min(tb, B)))


def _legalize_tb(tb, B):
    """The (tb, Ap) output block is layout-legal iff tb spans the whole (padded)
    batch or tb is a multiple of 8."""
    tb = max(1, min(int(tb), B))
    if tb >= B or B <= 8:
        return B
    return min(max(8, (tb // 8) * 8), B)


def sparse_ffnn(feature_vector, w1, b1, w2, b2, *, tb=None, chunk_rows=512,
                stream_dtype=jnp.float32, vmem_limit_bytes=None,
                x_buffer_count=None):
    """SparseFFNN forward.  feature_vector: (B, A, F); w1: (H, F); b1: (H,);
    w2: (1, H); b2: (1,) in the PyTorch nn.Linear layout.  Returns (B, A, 1)
    probabilities (softmax over the action axis).

    stream_dtype=jnp.bfloat16 halves the HBM traffic of the dominant x stream
    (~2x end-to-end on every generation) at ~1e-3 accuracy; f32 is the default.
    b2 is accepted for API fidelity but never reaches the kernel: softmax is
    shift-invariant, so adding it is an exact no-op on the output.
    """
    B, A, F = feature_vector.shape
    H = w1.shape[0]
    assert w1.shape == (H, F), w1.shape
    assert w2.shape == (1, H), w2.shape
    del b2  # exact no-op under the softmax (shift invariance)

    if vmem_limit_bytes is None:
        vmem_limit_bytes = _default_vmem_limit_bytes()
    stream_dtype = jnp.dtype(stream_dtype)
    x_itemsize = stream_dtype.itemsize

    Ap = _round_up(A, 8)                      # keeps in-kernel reshapes tile-aligned
    if tb is None:
        tb = _pick_tb(B, Ap, F, H, x_itemsize, vmem_limit_bytes, chunk_rows)
    tb = _legalize_tb(tb, B)
    grid_n = _cdiv(B, tb)
    if grid_n > 1:
        # Rebalance: spread B evenly over the chosen number of grid steps so batch
        # padding is bounded by ~8 rows per step instead of up to a whole tile.
        tb = _round_up(_cdiv(B, grid_n), 8)
    B_pad = grid_n * tb
    chunk_b = max(1, min(tb, max(1, chunk_rows // Ap)))   # batch rows per in-kernel chunk

    x = feature_vector.astype(stream_dtype)
    if B_pad != B or Ap != A:
        x = jnp.pad(x, ((0, B_pad - B), (0, Ap - A), (0, 0)))
    w1t = jnp.asarray(w1).astype(stream_dtype).T                            # (F, H)
    bw = jnp.concatenate([jnp.asarray(b1, jnp.float32).reshape(1, H),
                          jnp.asarray(w2, jnp.float32).reshape(1, H)], 0)   # (2, H)

    cost = pl.CostEstimate(
        flops=2 * B_pad * Ap * F * H + 4 * B_pad * Ap * H + 8 * B_pad * Ap,
        transcendentals=B_pad * Ap,
        bytes_accessed=(x_itemsize * (B_pad * Ap * F + F * H)
                        + 4 * (2 * H + B_pad * Ap)),
    )

    x_spec_kwargs = {}
    if x_buffer_count is not None and x_buffer_count != 2:
        # e.g. Buffered(3) on v5e where per-step DMA is the long pole and the
        # 128 MiB VMEM has headroom; keep the default (2) elsewhere.
        x_spec_kwargs["pipeline_mode"] = pl.Buffered(x_buffer_count)
    in_specs = [
        pl.BlockSpec((tb, Ap, F), lambda i: (i, 0, 0), **x_spec_kwargs),  # streamed x
        pl.BlockSpec((F, H), lambda i: (0, 0)),                           # resident W1^T
        pl.BlockSpec((2, H), lambda i: (0, 0)),                           # resident [b1;w2]
    ]

    out = pl.pallas_call(
        functools.partial(_sparse_ffnn_kernel, a_valid=A, chunk_b=chunk_b),
        out_shape=jax.ShapeDtypeStruct((B_pad, Ap), jnp.float32),   # lane-dense scores
        grid_spec=pltpu.PrefetchScalarGridSpec(
            num_scalar_prefetch=0,
            grid=(grid_n,),
            in_specs=in_specs,
            out_specs=pl.BlockSpec((tb, Ap), lambda i: (i, 0)),
        ),
        compiler_params=pltpu.CompilerParams(
            dimension_semantics=("parallel",),     # shards batch across v7x's 2 TCs
            vmem_limit_bytes=int(vmem_limit_bytes),
        ),
        cost_estimate=cost,
    )(x, w1t, bw)

    return out[:B, :A][..., None]      # back to the PyTorch (B, A, 1) layout


if __name__ == "__main__":
    key = jax.random.PRNGKey(0)
    H = _HIDDEN

    def linear_init(k, out_f, in_f):
        # Mirrors nn.Linear default init: U(-1/sqrt(fan_in), 1/sqrt(fan_in)).
        bnd = 1.0 / (in_f ** 0.5)
        kw, kb = jax.random.split(k)
        w = jax.random.uniform(kw, (out_f, in_f), jnp.float32, -bnd, bnd)
        b = jax.random.uniform(kb, (out_f,), jnp.float32, -bnd, bnd)
        return w, b

    def reference(x, w1, b1, w2, b2):
        h = jnp.maximum(
            jnp.einsum("baf,hf->bah", x, w1,
                       precision=jax.lax.Precision.HIGHEST) + b1, 0.0)
        s = jnp.einsum("bah,oh->bao", h, w2,
                       precision=jax.lax.Precision.HIGHEST) + b2
        return jax.nn.softmax(s, axis=1)

    def check(k, B, A, F, **kw):
        kx, k1, k2 = jax.random.split(k, 3)
        x = jax.random.normal(kx, (B, A, F), dtype=jnp.float32)
        w1, b1 = linear_init(k1, H, F)
        w2, b2 = linear_init(k2, 1, H)
        out = jax.block_until_ready(sparse_ffnn(x, w1, b1, w2, b2, **kw))
        ref = reference(x, w1, b1, w2, b2)
        assert out.shape == (B, A, 1), out.shape
        err = float(jnp.max(jnp.abs(out - ref)))
        assert jnp.allclose(out, ref, atol=1e-5, rtol=1e-5), (B, A, F, err)

    k1, k2, k3 = jax.random.split(key, 3)
    # 1) Default auto-tiled path: tb from the generation-aware VMEM budget
    #    (capped so the grid has 2 steps at this size), single in-kernel chunk.
    check(k1, B=16, A=8, F=64)
    # 2) Multi-chunk in-kernel epilogue: forces the fori_loop + static-tail path
    #    (tb=8 batch rows, 3 batch rows per chunk -> 2 full chunks + tail of 2).
    check(k2, B=16, A=8, F=64, tb=8, chunk_rows=24)
    # 3) Ragged shapes: A not a multiple of 8 (padded + masked softmax lanes) and a
    #    batch the tile does not evenly divide (zero-padded batch, sliced output).
    check(k3, B=5, A=5, F=40)

    print("KERNEL_OK")
</pallas_src>

<mosaic_0001>
module attributes {stable_mosaic.version = 11 : i64} {
  func.func @_sparse_ffnn_kernel(%arg0: i32, %arg1: memref<8x8x64xf32, #tpu.memory_space<vmem>>, %arg2: memref<64x32xf32, #tpu.memory_space<vmem>>, %arg3: memref<2x32xf32, #tpu.memory_space<vmem>>, %arg4: memref<8x8xf32, #tpu.memory_space<vmem>>) attributes {dimension_semantics = [#tpu.dimension_semantics<parallel>], iteration_bounds = array<i64: 2>, scalar_prefetch = 0 : i64, scratch_operands = 0 : i64, tpu.core_type = #tpu.core_type<tc>, window_params = [{transform_indices = @transform_0, window_bounds = array<i64: 8, 8, 64>}, {pipeline_mode = #tpu.pipeline_mode<synchronous>, transform_indices = @transform_1, window_bounds = array<i64: 64, 32>}, {pipeline_mode = #tpu.pipeline_mode<synchronous>, transform_indices = @transform_2, window_bounds = array<i64: 2, 32>}, {transform_indices = @transform_3, window_bounds = array<i64: 8, 8>}]} {
    %c0 = arith.constant 0 : index
    %c0_0 = arith.constant 0 : index
    %0 = vector.load %arg2[%c0, %c0_0] : memref<64x32xf32, #tpu.memory_space<vmem>>, vector<64x32xf32>
    %c0_1 = arith.constant 0 : index
    %c0_2 = arith.constant 0 : index
    %1 = vector.load %arg3[%c0_1, %c0_2] : memref<2x32xf32, #tpu.memory_space<vmem>>, vector<1x32xf32>
    %c1 = arith.constant 1 : index
    %c0_3 = arith.constant 0 : index
    %2 = vector.load %arg3[%c1, %c0_3] : memref<2x32xf32, #tpu.memory_space<vmem>>, vector<1x32xf32>
    %c0_4 = arith.constant 0 : index
    %c0_5 = arith.constant 0 : index
    %c0_6 = arith.constant 0 : index
    %3 = vector.load %arg1[%c0_4, %c0_5, %c0_6] : memref<8x8x64xf32, #tpu.memory_space<vmem>>, vector<8x8x64xf32>
    %4 = vector.shape_cast %3 : vector<8x8x64xf32> to vector<64x64xf32>
    %cst = arith.constant dense<0.000000e+00> : vector<64x32xf32>
    %5 = tpu.matmul %4, %0, %cst {dimension_numbers = #tpu.dot_dimension_numbers<[1], [0], [0], [1], [0, 0, 1, 1], [], []>, precision = #tpu.contract_precision<fp32>} : vector<64x64xf32>, vector<64x32xf32>, vector<64x32xf32> -> vector<64x32xf32>
    %6 = vector.broadcast %1 : vector<1x32xf32> to vector<64x32xf32>
    %7 = arith.addf %5, %6 : vector<64x32xf32>
    %cst_7 = arith.constant 0.000000e+00 : f32
    %8 = vector.broadcast %cst_7 : f32 to vector<64x32xf32>
    %9 = arith.maximumf %7, %8 : vector<64x32xf32>
    %10 = vector.broadcast %2 : vector<1x32xf32> to vector<64x32xf32>
    %11 = arith.mulf %9, %10 : vector<64x32xf32>
    %12 = vector.shape_cast %11 : vector<64x32xf32> to vector<8x8x32xf32>
    %cst_8 = arith.constant dense<0.000000e+00> : vector<8x8xf32>
    %13 = vector.multi_reduction <add>, %12, %cst_8 [2] : vector<8x8x32xf32> to vector<8x8xf32>
    %cst_9 = arith.constant dense<0xFF800000> : vector<8xf32>
    %14 = vector.multi_reduction <maximumf>, %13, %cst_9 [1] : vector<8x8xf32> to vector<8xf32>
    %15 = vector.shape_cast %14 : vector<8xf32> to vector<8x1xf32>
    %16 = vector.broadcast %15 : vector<8x1xf32> to vector<8x8xf32>
    %17 = arith.subf %13, %16 : vector<8x8xf32>
    %18 = math.exp %17 : vector<8x8xf32>
    %cst_10 = arith.constant dense<0.000000e+00> : vector<8xf32>
    %19 = vector.multi_reduction <add>, %18, %cst_10 [1] : vector<8x8xf32> to vector<8xf32>
    %20 = vector.shape_cast %19 : vector<8xf32> to vector<8x1xf32>
    %21 = tpu.reciprocal %20 : vector<8x1xf32> -> vector<8x1xf32>
    %22 = vector.broadcast %21 : vector<8x1xf32> to vector<8x8xf32>
    %23 = arith.mulf %18, %22 : vector<8x8xf32>
    %c0_11 = arith.constant 0 : index
    %c0_12 = arith.constant 0 : index
    %24 = vector.load %arg4[%c0_11, %c0_12] : memref<8x8xf32, #tpu.memory_space<vmem>>, vector<8x8xf32>
    tpu.vector_store %arg4[%c0_11, %c0_12], %23 {strides = array<i32>} : memref<8x8xf32, #tpu.memory_space<vmem>>, vector<8x8xf32>,
    return
  }
  func.func @transform_0(%arg0: i32) -> (i32, i32, i32) {
    %c0_i32 = arith.constant 0 : i32
    %c0_i32_0 = arith.constant 0 : i32
    %c0_i32_1 = arith.constant 0 : i32
    return %arg0, %c0_i32, %c0_i32_0 : i32, i32, i32
  }
  func.func @transform_1(%arg0: i32) -> (i32, i32) {
    %c0_i32 = arith.constant 0 : i32
    %c0_i32_0 = arith.constant 0 : i32
    %c0_i32_1 = arith.constant 0 : i32
    return %c0_i32, %c0_i32_0 : i32, i32
  }
  func.func @transform_2(%arg0: i32) -> (i32, i32) {
    %c0_i32 = arith.constant 0 : i32
    %c0_i32_0 = arith.constant 0 : i32
    %c0_i32_1 = arith.constant 0 : i32
    return %c0_i32, %c0_i32_0 : i32, i32
  }
  func.func @transform_3(%arg0: i32) -> (i32, i32) {
    %c0_i32 = arith.constant 0 : i32
    %c0_i32_0 = arith.constant 0 : i32
    return %arg0, %c0_i32 : i32, i32
  }
}

</mosaic_0001>

<llo_original>
// kernel: tpu_custom_call.1
$region0: #{tpu_custom_call.1}
  #allocation0 [shape = 'u32[]', space=smem, size = 0x4, offset = 0x4, fixed_abs, tag = 'smem constant byte address 0x4 - core index']
  #allocation1 [shape = 'u32[144,128]{1,0:T(1,128)}', space=vmem, size = 0x12000, scoped, tag = 'internal scratch']
  %s0 = inlined_call_operand.hbm [shape: f32[16,8,64], index: 0, kind: input, shape index: {}]
  %s1 = inlined_call_operand.vmem [shape: f32[64,32], index: 1, kind: input, shape index: {}]
  %s2 = inlined_call_operand.vmem [shape: f32[2,32], index: 2, kind: input, shape index: {}]
  %s3 = inlined_call_operand.vmem [shape: f32[16,8], index: 3, kind: output, shape index: {}]
  %s4 = sld [smem:[#allocation0]]
  $region49: #{tpu_custom_call.1} parent=0
    _
  %s6 = ssub.s32 1, %s4
  %s7 = scalar_select 0, %s6, %s4
  $region1: #{tpu_custom_call.1} parent=0
    #allocation2 [shape = 'u8[65536]{0}', space=vmem, size = 0x10000, scoped, tag = 'input window, operand 0']
    #allocation3 [shape = 's32[2]{0}', space=sflag, size = 0x8, scoped, tag = 'scoped memory for tpu_custom_call.1']
    %8 = vsyncpa [#allocation3], 0
    %s9 = scalar_lea.sflag [#allocation3], 1
    %10 = vsyncpa %s9, 0
    loop: start=0, step=1, limit=4
    $region2: #{tpu_custom_call.1} parent=1 // loop_pre_header
      _
    $region3: #{tpu_custom_call.1} parent=1 // loop_header
      %s12 = sphi 0, %s16
      %p13 = scmp.ge.s32.totalorder %s12, 4
      %s22 = sphi 0, %s24
      %s25 = sphi 0, %s22
      %s26 = sphi 0, %s25
      %s42 = sphi 0, %s26
      %s46 = sphi 0, %s46
      %s48 = sphi 0, %s46
      %s49 = sphi 0, %s48
      %s63 = sphi 0, %s49
      %s67 = sphi 0, %s67
      %s69 = sphi 0, %s67
      %s70 = sphi 0, %s69
      %s84 = sphi 0, %s70
      %s90 = sphi 0, %s92
      %s93 = sphi 0, %s90
      %s94 = sphi 0, %s93
      %s110 = sphi 0, %s94
    $region4: #{tpu_custom_call.1} parent=1 // loop_header_branch
      %15 = sbr.rel (%p13) target = $region8
    $region5: #{tpu_custom_call.1} parent=1 // loop_body
      %s17 = ssub.s32 %s12, 1
      %s18 = ssub.s32 %s12, 2
      %s19 = sadd.s32 %s12, 1
      %s20 = ssub.s32 %s12, %s19
      %p21 = scmp.eq.s32.totalorder %s20, 0
      %s23 = sadd.s32 %s22, 1
      %s24 = scalar_select %p21, %s22, %s23
      %p27 = pneg %p21
      %p28 = scmp.eq.s32.totalorder %s12, 1
      %p29 = por %p27, %p28
      %p30 = scmp.ne.s32.totalorder %s22, %s25
      %p31 = scmp.eq.s32.totalorder %s12, 0
      %p32 = por %p30, %p31
      %p33 = scmp.ne.s32.totalorder %s22, %s25
      %p34 = scmp.eq.s32.totalorder %s17, 1
      %p35 = por %p33, %p34
      %p36 = scmp.ne.s32.totalorder %s25, %s26
      %p37 = scmp.eq.s32.totalorder %s17, 0
      %p38 = por %p36, %p37
      %p39 = scmp.ne.s32.totalorder %s25, %s26
      %p40 = scmp.eq.s32.totalorder %s18, 1
      %p41 = por %p39, %p40
      %p43 = scmp.ne.s32.totalorder %s26, %s42
      %p44 = scmp.eq.s32.totalorder %s18, 0
      %p45 = por %p43, %p44
      %s47 = sadd.s32 %s46, 1
      %p50 = scmp.eq.s32.totalorder %s12, 1
      %p51 = scmp.ne.s32.totalorder %s46, %s48
      %p52 = scmp.eq.s32.totalorder %s12, 0
      %p53 = por %p51, %p52
      %p54 = scmp.ne.s32.totalorder %s46, %s48
      %p55 = scmp.eq.s32.totalorder %s17, 1
      %p56 = por %p54, %p55
      %p57 = scmp.ne.s32.totalorder %s48, %s49
      %p58 = scmp.eq.s32.totalorder %s17, 0
      %p59 = por %p57, %p58
      %p60 = scmp.ne.s32.totalorder %s48, %s49
      %p61 = scmp.eq.s32.totalorder %s18, 1
      %p62 = por %p60, %p61
      %p64 = scmp.ne.s32.totalorder %s49, %s63
      %p65 = scmp.eq.s32.totalorder %s18, 0
      %p66 = por %p64, %p65
      %s68 = sadd.s32 %s67, 1
      %p71 = scmp.eq.s32.totalorder %s12, 1
      %p72 = scmp.ne.s32.totalorder %s67, %s69
      %p73 = scmp.eq.s32.totalorder %s12, 0
      %p74 = por %p72, %p73
      %p75 = scmp.ne.s32.totalorder %s67, %s69
      %p76 = scmp.eq.s32.totalorder %s17, 1
      %p77 = por %p75, %p76
      %p78 = scmp.ne.s32.totalorder %s69, %s70
      %p79 = scmp.eq.s32.totalorder %s17, 0
      %p80 = por %p78, %p79
      %p81 = scmp.ne.s32.totalorder %s69, %s70
      %p82 = scmp.eq.s32.totalorder %s18, 1
      %p83 = por %p81, %p82
      %p85 = scmp.ne.s32.totalorder %s70, %s84
      %p86 = scmp.eq.s32.totalorder %s18, 0
      %p87 = por %p85, %p86
      %s88 = ssub.s32 %s12, %s19
      %p89 = scmp.eq.s32.totalorder %s88, 0
      %s91 = sadd.s32 %s90, 1
      %s92 = scalar_select %p89, %s90, %s91
      %p95 = pneg %p89
      %p96 = scmp.eq.s32.totalorder %s12, 1
      %p97 = por %p95, %p96
      %p98 = scmp.ne.s32.totalorder %s90, %s93
      %p99 = scmp.eq.s32.totalorder %s12, 0
      %p100 = por %p98, %p99
      %p101 = scmp.ne.s32.totalorder %s90, %s93
      %p102 = scmp.eq.s32.totalorder %s17, 1
      %p103 = por %p101, %p102
      %p104 = scmp.ne.s32.totalorder %s93, %s94
      %p105 = scmp.eq.s32.totalorder %s17, 0
      %p106 = por %p104, %p105
      %p107 = scmp.ne.s32.totalorder %s93, %s94
      %p108 = scmp.eq.s32.totalorder %s18, 1
      %p109 = por %p107, %p108
      %p111 = scmp.ne.s32.totalorder %s94, %s110
      %p112 = scmp.eq.s32.totalorder %s18, 0
      %p113 = por %p111, %p112
      %p114 = scmp.le.s32.totalorder 1, %s12
      %p115 = scmp.lt.s32.totalorder %s12, 3
      %p116 = pnand %p114, %p115
      %p117 = pneg %p116
      // Predicated region
      $region9: #{tpu_custom_call.1} parent=5 // pred_check
        _
      $region10: #{tpu_custom_call.1} parent=5 // pred_check_branch
        %119 = sbr.rel (%p116) target = $region12
      $region11: #{tpu_custom_call.1} parent=5 // pred_region
        %s120 = ssub.s32 %s12, 1
        // Predicated region
        $region13: #{tpu_custom_call.1} parent=11 // pred_check
          %p121 = pneg %p59
        $region14: #{tpu_custom_call.1} parent=11 // pred_check_branch
          %123 = sbr.rel (%p121) target = $region16
        $region15: #{tpu_custom_call.1} parent=11 // pred_region
          _
        $region16: #{tpu_custom_call.1} parent=11 // pred_fallthru
          _
        // Predicated region
        $region17: #{tpu_custom_call.1} parent=11 // pred_check
          %p124 = pneg %p80
        $region18: #{tpu_custom_call.1} parent=11 // pred_check_branch
          %126 = sbr.rel (%p124) target = $region20
        $region19: #{tpu_custom_call.1} parent=11 // pred_region
          _
        $region20: #{tpu_custom_call.1} parent=11 // pred_fallthru
          _
      $region12: #{tpu_custom_call.1} parent=5 // pred_fallthru
        _
      %p127 = scmp.lt.s32.totalorder %s12, 2
      // Predicated region
      $region21: #{tpu_custom_call.1} parent=5 // pred_check
        %p128 = pneg %p127
      $region22: #{tpu_custom_call.1} parent=5 // pred_check_branch
        %130 = sbr.rel (%p128) target = $region24
      $region23: #{tpu_custom_call.1} parent=5 // pred_region
        // Predicated region
        $region25: #{tpu_custom_call.1} parent=23 // pred_check
          %p131 = pneg %p32
        $region26: #{tpu_custom_call.1} parent=23 // pred_check_branch
          %133 = sbr.rel (%p131) target = $region28
        $region27: #{tpu_custom_call.1} parent=23 // pred_region
          %s134 = sand.u32 %s22, 1
          %s135 = scalar_lea.sflag [#allocation3], %s134
          %s136 = sand.u32 %s22, 1
          %s137 = smul.addr %s136, 64
          %s138 = scalar_lea.vmem [#allocation2], %s137
          %s139 = smul.u32 8, %s12
          %s141 = ssub.s32 1024, 1024
          %142 = vsyncadd %s135, %s141
          %s143 = smul.addr %s139, 128
          %s144 = scalar_lea.hbm %s0, %s143
          %s145 = sshll.u32 %s138, 4
          %s146 = int_to_ptr.vmem [resolvable:$true] %s145
          %151 = dma.hbm_to_vmem [thread:$0]  %s144, 1024, %s146, %s135, 128, 128, 8
        $region28: #{tpu_custom_call.1} parent=23 // pred_fallthru
          _
      $region24: #{tpu_custom_call.1} parent=5 // pred_fallthru
        _
      %p152 = scmp.le.s32.totalorder 1, %s12
      %p153 = scmp.lt.s32.totalorder %s12, 3
      %p154 = pnand %p152, %p153
      %p155 = pneg %p154
      // Predicated region
      $region29: #{tpu_custom_call.1} parent=5 // pred_check
        _
      $region30: #{tpu_custom_call.1} parent=5 // pred_check_branch
        %157 = sbr.rel (%p154) target = $region32
      $region31: #{tpu_custom_call.1} parent=5 // pred_region
        %s158 = ssub.s32 %s12, 1
        %s159 = sand.u32 %s25, 1
        %s160 = scalar_lea.sflag [#allocation3], %s159
        %s161 = sand.u32 %s25, 1
        %s162 = smul.addr %s161, 64
        %s163 = scalar_lea.vmem [#allocation2], %s162
        // Predicated region
        $region33: #{tpu_custom_call.1} parent=31 // pred_check
          %p164 = pneg %p38
        $region34: #{tpu_custom_call.1} parent=31 // pred_check_branch
          %166 = sbr.rel (%p164) target = $region36
        $region35: #{tpu_custom_call.1} parent=31 // pred_region
          %167 = dma.done %s160, 1024
        $region36: #{tpu_custom_call.1} parent=31 // pred_fallthru
          _
        %s168 = sand.u32 %s25, 1
        %s169 = scalar_lea.sflag [#allocation3], %s168
        %s170 = sand.u32 %s25, 1
        %s171 = smul.addr %s170, 64
        %s172 = scalar_lea.vmem [#allocation2], %s171
        %p173 = pneg %p38
        %p174 = pneg %p35
        %p175 = pneg %p59
        %p176 = pneg %p56
        %p177 = pneg %p80
        %p178 = pneg %p77
        %p179 = pneg %p106
        %p180 = pneg %p103
        %p181 = scmp.lt.s32.totalorder %s17, 1
        %s182 = scalar_select %p181, %s17, 1
        %s183 = smul.addr %s182, 8
        %s184 = scalar_lea.vmem %s3, %s183
        %s185 = smul.u32 8, %s17
        %p186 = scmp.lt.s32.totalorder %s17, 1
        %s187 = scalar_select %p186, %s17, 1
        %s188 = smul.addr %s187, 8
        %s189 = scalar_lea.vmem %s3, %s188
        %v190 = vld [vmem:[%s1] sm:$0xff]
        %v191 = vld [vmem:[%s1 + $0x8] sm:$0xff]
        %v192 = vld [vmem:[%s1 + $0x10] sm:$0xff]
        %v193 = vld [vmem:[%s1 + $0x18] sm:$0xff]
        %v194 = vld [vmem:[%s1 + $0x20] sm:$0xff]
        %v195 = vld [vmem:[%s1 + $0x28] sm:$0xff]
        %v196 = vld [vmem:[%s1 + $0x30] sm:$0xff]
        %v197 = vld [vmem:[%s1 + $0x38] sm:$0xff]
        %v198 = vld [vmem:[%s2] sm:$0x1]
        %v199 = vld [vmem:[%s2 + $0x1] sm:$0x1]
        %v200 = vld [vmem:[%s163] sm:$0xff]
        %v201 = vld [vmem:[%s163 + $0x8] sm:$0xff]
        %v202 = vld [vmem:[%s163 + $0x10] sm:$0xff]
        %v203 = vld [vmem:[%s163 + $0x18] sm:$0xff]
        %v204 = vld [vmem:[%s163 + $0x20] sm:$0xff]
        %v205 = vld [vmem:[%s163 + $0x28] sm:$0xff]
        %v206 = vld [vmem:[%s163 + $0x30] sm:$0xff]
        %v207 = vld [vmem:[%s163 + $0x38] sm:$0xff]
        %v208 = vlaneseq
        %v209 = vshrl.u32 %v208, 7
        %v210 = vsub.s32 0, %v209
        %v211 = vrot.slane %v198, %v210
        %vm212 = vcmask 523264
        %v214 = vsel %vm212, %v200, 0
        %v217 = vsel %vm212, %v201, 0
        %v220 = vsel %vm212, %v202, 0
        %v223 = vsel %vm212, %v203, 0
        %v226 = vsel %vm212, %v204, 0
        %v229 = vsel %vm212, %v205, 0
        %v232 = vsel %vm212, %v206, 0
        %v235 = vsel %vm212, %v207, 0
        %237 = vmatprep.subr.mxu0 0.0
        %v238 = vand.u32 %v190, 4294901760
        %239 = vmatpush1.msra.mxu0 %v238
        %240 = vmatprep.subr.mxu0 0.0
        %v241 = vand.u32 %v191, 4294901760
        %242 = vmatpush1.msra.mxu0 %v241
        %243 = vmatprep.subr.mxu0 0.0
        %v244 = vand.u32 %v192, 4294901760
        %245 = vmatpush1.msra.mxu0 %v244
        %246 = vmatprep.subr.mxu0 0.0
        %v247 = vand.u32 %v193, 4294901760
        %248 = vmatpush1.msra.mxu0 %v247
        %249 = vmatprep.subr.mxu0 0.0
        %v250 = vand.u32 %v194, 4294901760
        %251 = vmatpush1.msra.mxu0 %v250
        %252 = vmatprep.subr.mxu0 0.0
        %v253 = vand.u32 %v195, 4294901760
        %254 = vmatpush1.msra.mxu0 %v253
        %255 = vmatprep.subr.mxu0 0.0
        %v256 = vand.u32 %v196, 4294901760
        %257 = vmatpush1.msra.mxu0 %v256
        %258 = vmatprep.subr.mxu0 0.0
        %v259 = vand.u32 %v197, 4294901760
        %260 = vmatpush1.msra.mxu0 %v259
        %261 = vmatprep.subr.mxu0 0.0
        %262 = vmatpush1.msra.mxu0 0.0
        %263 = vmatprep.subr.mxu0 0.0
        %264 = vmatpush1.msra.mxu0 0.0
        %265 = vmatprep.subr.mxu0 0.0
        %266 = vmatpush1.msra.mxu0 0.0
        %267 = vmatprep.subr.mxu0 0.0
        %268 = vmatpush1.msra.mxu0 0.0
        %269 = vmatprep.subr.mxu0 0.0
        %270 = vmatpush1.msra.mxu0 0.0
        %271 = vmatprep.subr.mxu0 0.0
        %272 = vmatpush1.msra.mxu0 0.0
        %273 = vmatprep.subr.mxu0 0.0
        %274 = vmatpush1.msra.mxu0 0.0
        %275 = vmatprep.subr.mxu0 0.0
        %276 = vmatpush1.msra.mxu0 0.0
        %277 = vmatprep.subr.mxu0 0.0
        %278 = vmatpush1.msra.mxu0 0.0
        %279 = vmatprep.subr.mxu0 0.0
        %280 = vmatpush1.msra.mxu0 0.0
        %281 = vmatprep.subr.mxu0 0.0
        %282 = vmatpush1.msra.mxu0 0.0
        %283 = vmatprep.subr.mxu0 0.0
        %284 = vmatpush1.msra.mxu0 0.0
        %285 = vmatprep.subr.mxu0 0.0
        %286 = vmatpush1.msra.mxu0 0.0
        %287 = vmatprep.subr.mxu0 0.0
        %288 = vmatpush1.msra.mxu0 0.0
        %289 = vmatprep.subr.mxu0 0.0
        %290 = vmatpush1.msra.mxu0 0.0
        %291 = vmatprep.subr.mxu0 0.0
        %292 = vmatpush1.msra.mxu0 0.0
        %293 = vmatprep.subr.mxu0 0.0
        %294 = vmatpush1.msra.mxu0 0.0
        %295 = vmatprep.subr.mxu0 0.0
        %296 = vmatpush1.msra.mxu0 0.0
        %297 = vmatprep.subr.mxu0 0.0
        %298 = vmatpush1.msra.mxu0 0.0
        %299 = vmatprep.subr.mxu0 0.0
        %300 = vmatpush1.msra.mxu0 0.0
        %301 = vmatprep.subr.mxu0 0.0
        %302 = vmatpush1.msra.mxu0 0.0
        %303 = vmatprep.subr.mxu0 0.0
        %304 = vmatpush1.msra.mxu0 0.0
        %305 = vmatprep.subr.mxu0 0.0
        %306 = vmatpush1.msra.mxu0 0.0
        %307 = vmatprep.subr.mxu0 0.0
        %308 = vmatpush1.msra.mxu0 0.0
        %309 = vmatprep.mubr.f32.mxu0 0.0
        %v310 = vand.u32 %v214, 4294901760
        %v311 = vsub.f32 %v214, %v310
        %v312 = vand.u32 %v311, 4294901760
        %v313 = vsub.f32 %v311, %v312
        %v314 = vand.u32 %v313, 4294901760
        %315 = vmatmul.mubr.f32.gmra.mrb[0].mxu0 %v314
        %v316 = vpop.f32.mrb[0].mxu0
        %v317 = vadd.f32 %v211, %v316
        %v318 = vpop.f32.mrb[0].mxu0
        %319 = vmatprep.mubr.f32.mxu0 0.0
        %v320 = vand.u32 %v217, 4294901760
        %v321 = vsub.f32 %v217, %v320
        %v322 = vand.u32 %v321, 4294901760
        %v323 = vsub.f32 %v321, %v322
        %v324 = vand.u32 %v323, 4294901760
        %325 = vmatmul.mubr.f32.gmra.mrb[0].mxu0 %v324
        %v326 = vpop.f32.mrb[0].mxu0
        %v327 = vadd.f32 %v211, %v326
        %v328 = vpop.f32.mrb[0].mxu0
        %329 = vmatprep.mubr.f32.mxu0 0.0
        %v330 = vand.u32 %v220, 4294901760
        %v331 = vsub.f32 %v220, %v330
        %v332 = vand.u32 %v331, 4294901760
        %v333 = vsub.f32 %v331, %v332
        %v334 = vand.u32 %v333, 4294901760
        %335 = vmatmul.mubr.f32.gmra.mrb[0].mxu0 %v334
        %v336 = vpop.f32.mrb[0].mxu0
        %v337 = vadd.f32 %v211, %v336
        %v338 = vpop.f32.mrb[0].mxu0
        %339 = vmatprep.mubr.f32.mxu0 0.0
        %v340 = vand.u32 %v223, 4294901760
        %v341 = vsub.f32 %v223, %v340
        %v342 = vand.u32 %v341, 4294901760
        %v343 = vsub.f32 %v341, %v342
        %v344 = vand.u32 %v343, 4294901760
        %345 = vmatmul.mubr.f32.gmra.mrb[0].mxu0 %v344
        %v346 = vpop.f32.mrb[0].mxu0
        %v347 = vadd.f32 %v211, %v346
        %v348 = vpop.f32.mrb[0].mxu0
        %349 = vmatprep.mubr.f32.mxu0 0.0
        %v350 = vand.u32 %v226, 4294901760
        %v351 = vsub.f32 %v226, %v350
        %v352 = vand.u32 %v351, 4294901760
        %v353 = vsub.f32 %v351, %v352
        %v354 = vand.u32 %v353, 4294901760
        %355 = vmatmul.mubr.f32.gmra.mrb[0].mxu0 %v354
        %v356 = vpop.f32.mrb[0].mxu0
        %v357 = vadd.f32 %v211, %v356
        %v358 = vpop.f32.mrb[0].mxu0
        %359 = vmatprep.mubr.f32.mxu0 0.0
        %v360 = vand.u32 %v229, 4294901760
        %v361 = vsub.f32 %v229, %v360
        %v362 = vand.u32 %v361, 4294901760
        %v363 = vsub.f32 %v361, %v362
        %v364 = vand.u32 %v363, 4294901760
        %365 = vmatmul.mubr.f32.gmra.mrb[0].mxu0 %v364
        %v366 = vpop.f32.mrb[0].mxu0
        %v367 = vadd.f32 %v211, %v366
        %v368 = vpop.f32.mrb[0].mxu0
        %369 = vmatprep.mubr.f32.mxu0 0.0
        %v370 = vand.u32 %v232, 4294901760
        %v371 = vsub.f32 %v232, %v370
        %v372 = vand.u32 %v371, 4294901760
        %v373 = vsub.f32 %v371, %v372
        %v374 = vand.u32 %v373, 4294901760
        %375 = vmatmul.mubr.f32.gmra.mrb[0].mxu0 %v374
        %v376 = vpop.f32.mrb[0].mxu0
        %v377 = vadd.f32 %v211, %v376
        %v378 = vpop.f32.mrb[0].mxu0
        %379 = vmatprep.mubr.f32.mxu0 0.0
        %v380 = vand.u32 %v235, 4294901760
        %v381 = vsub.f32 %v235, %v380
        %v382 = vand.u32 %v381, 4294901760
        %v383 = vsub.f32 %v381, %v382
        %v384 = vand.u32 %v383, 4294901760
        %385 = vmatmul.mubr.f32.gmra.mrb[0].mxu0 %v384
        %v386 = vpop.f32.mrb[0].mxu0
        %v387 = vadd.f32 %v211, %v386
        %v388 = vpop.f32.mrb[0].mxu0
        %389 = vdwg.mxu0
        %390 = vmatprep.subr.mxu0 0.0
        %v391 = vand.u32 %v190, 4294901760
        %v392 = vsub.f32 %v190, %v391
        %v393 = vand.u32 %v392, 4294901760
        %v394 = vsub.f32 %v392, %v393
        %v395 = vand.u32 %v394, 4294901760
        %396 = vmatpush1.msra.mxu0 %v395
        %397 = vmatprep.subr.mxu0 0.0
        %v398 = vand.u32 %v191, 4294901760
        %v399 = vsub.f32 %v191, %v398
        %v400 = vand.u32 %v399, 4294901760
        %v401 = vsub.f32 %v399, %v400
        %v402 = vand.u32 %v401, 4294901760
        %403 = vmatpush1.msra.mxu0 %v402
        %404 = vmatprep.subr.mxu0 0.0
        %v405 = vand.u32 %v192, 4294901760
        %v406 = vsub.f32 %v192, %v405
        %v407 = vand.u32 %v406, 4294901760
        %v408 = vsub.f32 %v406, %v407
        %v409 = vand.u32 %v408, 4294901760
        %410 = vmatpush1.msra.mxu0 %v409
        %411 = vmatprep.subr.mxu0 0.0
        %v412 = vand.u32 %v193, 4294901760
        %v413 = vsub.f32 %v193, %v412
        %v414 = vand.u32 %v413, 4294901760
        %v415 = vsub.f32 %v413, %v414
        %v416 = vand.u32 %v415, 4294901760
        %417 = vmatpush1.msra.mxu0 %v416
        %418 = vmatprep.subr.mxu0 0.0
        %v419 = vand.u32 %v194, 4294901760
        %v420 = vsub.f32 %v194, %v419
        %v421 = vand.u32 %v420, 4294901760
        %v422 = vsub.f32 %v420, %v421
        %v423 = vand.u32 %v422, 4294901760
        %424 = vmatpush1.msra.mxu0 %v423
        %425 = vmatprep.subr.mxu0 0.0
        %v426 = vand.u32 %v195, 4294901760
        %v427 = vsub.f32 %v195, %v426
        %v428 = vand.u32 %v427, 4294901760
        %v429 = vsub.f32 %v427, %v428
        %v430 = vand.u32 %v429, 4294901760
        %431 = vmatpush1.msra.mxu0 %v430
        %432 = vmatprep.subr.mxu0 0.0
        %v433 = vand.u32 %v196, 4294901760
        %v434 = vsub.f32 %v196, %v433
        %v435 = vand.u32 %v434, 4294901760
        %v436 = vsub.f32 %v434, %v435
        %v437 = vand.u32 %v436, 4294901760
        %438 = vmatpush1.msra.mxu0 %v437
        %439 = vmatprep.subr.mxu0 0.0
        %v440 = vand.u32 %v197, 4294901760
        %v441 = vsub.f32 %v197, %v440
        %v442 = vand.u32 %v441, 4294901760
        %v443 = vsub.f32 %v441, %v442
        %v444 = vand.u32 %v443, 4294901760
        %445 = vmatpush1.msra.mxu0 %v444
        %446 = vmatprep.subr.mxu0 0.0
        %447 = vmatpush1.msra.mxu0 0.0
        %448 = vmatprep.subr.mxu0 0.0
        %449 = vmatpush1.msra.mxu0 0.0
        %450 = vmatprep.subr.mxu0 0.0
        %451 = vmatpush1.msra.mxu0 0.0
        %452 = vmatprep.subr.mxu0 0.0
        %453 = vmatpush1.msra.mxu0 0.0
        %454 = vmatprep.subr.mxu0 0.0
        %455 = vmatpush1.msra.mxu0 0.0
        %456 = vmatprep.subr.mxu0 0.0
        %457 = vmatpush1.msra.mxu0 0.0
        %458 = vmatprep.subr.mxu0 0.0
        %459 = vmatpush1.msra.mxu0 0.0
        %460 = vmatprep.subr.mxu0 0.0
        %461 = vmatpush1.msra.mxu0 0.0
        %462 = vmatprep.subr.mxu0 0.0
        %463 = vmatpush1.msra.mxu0 0.0
        %464 = vmatprep.subr.mxu0 0.0
        %465 = vmatpush1.msra.mxu0 0.0
        %466 = vmatprep.subr.mxu0 0.0
        %467 = vmatpush1.msra.mxu0 0.0
        %468 = vmatprep.subr.mxu0 0.0
        %469 = vmatpush1.msra.mxu0 0.0
        %470 = vmatprep.subr.mxu0 0.0
        %471 = vmatpush1.msra.mxu0 0.0
        %472 = vmatprep.subr.mxu0 0.0
        %473 = vmatpush1.msra.mxu0 0.0
        %474 = vmatprep.subr.mxu0 0.0
        %475 = vmatpush1.msra.mxu0 0.0
        %476 = vmatprep.subr.mxu0 0.0
        %477 = vmatpush1.msra.mxu0 0.0
        %478 = vmatprep.subr.mxu0 0.0
        %479 = vmatpush1.msra.mxu0 0.0
        %480 = vmatprep.subr.mxu0 0.0
        %481 = vmatpush1.msra.mxu0 0.0
        %482 = vmatprep.subr.mxu0 0.0
        %483 = vmatpush1.msra.mxu0 0.0
        %484 = vmatprep.subr.mxu0 0.0
        %485 = vmatpush1.msra.mxu0 0.0
        %486 = vmatprep.subr.mxu0 0.0
        %487 = vmatpush1.msra.mxu0 0.0
        %488 = vmatprep.subr.mxu0 0.0
        %489 = vmatpush1.msra.mxu0 0.0
        %490 = vmatprep.subr.mxu0 0.0
        %491 = vmatpush1.msra.mxu0 0.0
        %492 = vmatprep.subr.mxu0 0.0
        %493 = vmatpush1.msra.mxu0 0.0
        %494 = vmatprep.mubr.f32.mxu0 0.0
        %v495 = vand.u32 %v214, 4294901760
        %496 = vmatmul.mubr.f32.gmra.mrb[0].mxu0 %v495
        %v497 = vpop.f32.mrb[0].mxu0
        %v498 = vadd.f32 %v317, %v497
        %v499 = vpop.f32.mrb[0].mxu0
        %500 = vmatprep.mubr.f32.mxu0 0.0
        %v501 = vand.u32 %v217, 4294901760
        %502 = vmatmul.mubr.f32.gmra.mrb[0].mxu0 %v501
        %v503 = vpop.f32.mrb[0].mxu0
        %v504 = vadd.f32 %v327, %v503
        %v505 = vpop.f32.mrb[0].mxu0
        %506 = vmatprep.mubr.f32.mxu0 0.0
        %v507 = vand.u32 %v220, 4294901760
        %508 = vmatmul.mubr.f32.gmra.mrb[0].mxu0 %v507
        %v509 = vpop.f32.mrb[0].mxu0
        %v510 = vadd.f32 %v337, %v509
        %v511 = vpop.f32.mrb[0].mxu0
        %512 = vmatprep.mubr.f32.mxu0 0.0
        %v513 = vand.u32 %v223, 4294901760
        %514 = vmatmul.mubr.f32.gmra.mrb[0].mxu0 %v513
        %v515 = vpop.f32.mrb[0].mxu0
        %v516 = vadd.f32 %v347, %v515
        %v517 = vpop.f32.mrb[0].mxu0
        %518 = vmatprep.mubr.f32.mxu0 0.0
        %v519 = vand.u32 %v226, 4294901760
        %520 = vmatmul.mubr.f32.gmra.mrb[0].mxu0 %v519
        %v521 = vpop.f32.mrb[0].mxu0
        %v522 = vadd.f32 %v357, %v521
        %v523 = vpop.f32.mrb[0].mxu0
        %524 = vmatprep.mubr.f32.mxu0 0.0
        %v525 = vand.u32 %v229, 4294901760
        %526 = vmatmul.mubr.f32.gmra.mrb[0].mxu0 %v525
        %v527 = vpop.f32.mrb[0].mxu0
        %v528 = vadd.f32 %v367, %v527
        %v529 = vpop.f32.mrb[0].mxu0
        %530 = vmatprep.mubr.f32.mxu0 0.0
        %v531 = vand.u32 %v232, 4294901760
        %532 = vmatmul.mubr.f32.gmra.mrb[0].mxu0 %v531
        %v533 = vpop.f32.mrb[0].mxu0
        %v534 = vadd.f32 %v377, %v533
        %v535 = vpop.f32.mrb[0].mxu0
        %536 = vmatprep.mubr.f32.mxu0 0.0
        %v537 = vand.u32 %v235, 4294901760
        %538 = vmatmul.mubr.f32.gmra.mrb[0].mxu0 %v537
        %v539 = vpop.f32.mrb[0].mxu0
        %v540 = vadd.f32 %v387, %v539
        %v541 = vpop.f32.mrb[0].mxu0
        %542 = vdwg.mxu0
        %543 = vmatprep.subr.mxu0 0.0
        %v544 = vand.u32 %v190, 4294901760
        %v545 = vsub.f32 %v190, %v544
        %546 = vmatpush1.msra.mxu0 %v545
        %547 = vmatprep.subr.mxu0 0.0
        %v548 = vand.u32 %v191, 4294901760
        %v549 = vsub.f32 %v191, %v548
        %550 = vmatpush1.msra.mxu0 %v549
        %551 = vmatprep.subr.mxu0 0.0
        %v552 = vand.u32 %v192, 4294901760
        %v553 = vsub.f32 %v192, %v552
        %554 = vmatpush1.msra.mxu0 %v553
        %555 = vmatprep.subr.mxu0 0.0
        %v556 = vand.u32 %v193, 4294901760
        %v557 = vsub.f32 %v193, %v556
        %558 = vmatpush1.msra.mxu0 %v557
        %559 = vmatprep.subr.mxu0 0.0
        %v560 = vand.u32 %v194, 4294901760
        %v561 = vsub.f32 %v194, %v560
        %562 = vmatpush1.msra.mxu0 %v561
        %563 = vmatprep.subr.mxu0 0.0
        %v564 = vand.u32 %v195, 4294901760
        %v565 = vsub.f32 %v195, %v564
        %566 = vmatpush1.msra.mxu0 %v565
        %567 = vmatprep.subr.mxu0 0.0
        %v568 = vand.u32 %v196, 4294901760
        %v569 = vsub.f32 %v196, %v568
        %570 = vmatpush1.msra.mxu0 %v569
        %571 = vmatprep.subr.mxu0 0.0
        %v572 = vand.u32 %v197, 4294901760
        %v573 = vsub.f32 %v197, %v572
        %574 = vmatpush1.msra.mxu0 %v573
        %575 = vmatprep.subr.mxu0 0.0
        %576 = vmatpush1.msra.mxu0 0.0
        %577 = vmatprep.subr.mxu0 0.0
        %578 = vmatpush1.msra.mxu0 0.0
        %579 = vmatprep.subr.mxu0 0.0
        %580 = vmatpush1.msra.mxu0 0.0
        %581 = vmatprep.subr.mxu0 0.0
        %582 = vmatpush1.msra.mxu0 0.0
        %583 = vmatprep.subr.mxu0 0.0
        %584 = vmatpush1.msra.mxu0 0.0
        %585 = vmatprep.subr.mxu0 0.0
        %586 = vmatpush1.msra.mxu0 0.0
        %587 = vmatprep.subr.mxu0 0.0
        %588 = vmatpush1.msra.mxu0 0.0
        %589 = vmatprep.subr.mxu0 0.0
        %590 = vmatpush1.msra.mxu0 0.0
        %591 = vmatprep.subr.mxu0 0.0
        %592 = vmatpush1.msra.mxu0 0.0
        %593 = vmatprep.subr.mxu0 0.0
        %594 = vmatpush1.msra.mxu0 0.0
        %595 = vmatprep.subr.mxu0 0.0
        %596 = vmatpush1.msra.mxu0 0.0
        %597 = vmatprep.subr.mxu0 0.0
        %598 = vmatpush1.msra.mxu0 0.0
        %599 = vmatprep.subr.mxu0 0.0
        %600 = vmatpush1.msra.mxu0 0.0
        %601 = vmatprep.subr.mxu0 0.0
        %602 = vmatpush1.msra.mxu0 0.0
        %603 = vmatprep.subr.mxu0 0.0
        %604 = vmatpush1.msra.mxu0 0.0
        %605 = vmatprep.subr.mxu0 0.0
        %606 = vmatpush1.msra.mxu0 0.0
        %607 = vmatprep.subr.mxu0 0.0
        %608 = vmatpush1.msra.mxu0 0.0
        %609 = vmatprep.subr.mxu0 0.0
        %610 = vmatpush1.msra.mxu0 0.0
        %611 = vmatprep.subr.mxu0 0.0
        %612 = vmatpush1.msra.mxu0 0.0
        %613 = vmatprep.subr.mxu0 0.0
        %614 = vmatpush1.msra.mxu0 0.0
        %615 = vmatprep.subr.mxu0 0.0
        %616 = vmatpush1.msra.mxu0 0.0
        %617 = vmatprep.subr.mxu0 0.0
        %618 = vmatpush1.msra.mxu0 0.0
        %619 = vmatprep.subr.mxu0 0.0
        %620 = vmatpush1.msra.mxu0 0.0
        %621 = vmatprep.subr.mxu0 0.0
        %622 = vmatpush1.msra.mxu0 0.0
        %623 = vmatprep.mubr.f32.mxu0 0.0
        %v624 = vand.u32 %v214, 4294901760
        %v625 = vsub.f32 %v214, %v624
        %626 = vmatmul.mubr.f32.gmra.mrb[0].mxu0 %v625
        %v627 = vpop.f32.mrb[0].mxu0
        %v628 = vadd.f32 %v498, %v627
        %v629 = vpop.f32.mrb[0].mxu0
        %630 = vmatprep.mubr.f32.mxu0 0.0
        %v631 = vand.u32 %v217, 4294901760
        %v632 = vsub.f32 %v217, %v631
        %633 = vmatmul.mubr.f32.gmra.mrb[0].mxu0 %v632
        %v634 = vpop.f32.mrb[0].mxu0
        %v635 = vadd.f32 %v504, %v634
        %v636 = vpop.f32.mrb[0].mxu0
        %637 = vmatprep.mubr.f32.mxu0 0.0
        %v638 = vand.u32 %v220, 4294901760
        %v639 = vsub.f32 %v220, %v638
        %640 = vmatmul.mubr.f32.gmra.mrb[0].mxu0 %v639
        %v641 = vpop.f32.mrb[0].mxu0
        %v642 = vadd.f32 %v510, %v641
        %v643 = vpop.f32.mrb[0].mxu0
        %644 = vmatprep.mubr.f32.mxu0 0.0
        %v645 = vand.u32 %v223, 4294901760
        %v646 = vsub.f32 %v223, %v645
        %647 = vmatmul.mubr.f32.gmra.mrb[0].mxu0 %v646
        %v648 = vpop.f32.mrb[0].mxu0
        %v649 = vadd.f32 %v516, %v648
        %v650 = vpop.f32.mrb[0].mxu0
        %651 = vmatprep.mubr.f32.mxu0 0.0
        %v652 = vand.u32 %v226, 4294901760
        %v653 = vsub.f32 %v226, %v652
        %654 = vmatmul.mubr.f32.gmra.mrb[0].mxu0 %v653
        %v655 = vpop.f32.mrb[0].mxu0
        %v656 = vadd.f32 %v522, %v655
        %v657 = vpop.f32.mrb[0].mxu0
        %658 = vmatprep.mubr.f32.mxu0 0.0
        %v659 = vand.u32 %v229, 4294901760
        %v660 = vsub.f32 %v229, %v659
        %661 = vmatmul.mubr.f32.gmra.mrb[0].mxu0 %v660
        %v662 = vpop.f32.mrb[0].mxu0
        %v663 = vadd.f32 %v528, %v662
        %v664 = vpop.f32.mrb[0].mxu0
        %665 = vmatprep.mubr.f32.mxu0 0.0
        %v666 = vand.u32 %v232, 4294901760
        %v667 = vsub.f32 %v232, %v666
        %668 = vmatmul.mubr.f32.gmra.mrb[0].mxu0 %v667
        %v669 = vpop.f32.mrb[0].mxu0
        %v670 = vadd.f32 %v534, %v669
        %v671 = vpop.f32.mrb[0].mxu0
        %672 = vmatprep.mubr.f32.mxu0 0.0
        %v673 = vand.u32 %v235, 4294901760
        %v674 = vsub.f32 %v235, %v673
        %675 = vmatmul.mubr.f32.gmra.mrb[0].mxu0 %v674
        %v676 = vpop.f32.mrb[0].mxu0
        %v677 = vadd.f32 %v540, %v676
        %v678 = vpop.f32.mrb[0].mxu0
        %679 = vdwg.mxu0
        %680 = vmatprep.subr.mxu0 0.0
        %v681 = vand.u32 %v190, 4294901760
        %682 = vmatpush1.msra.mxu0 %v681
        %683 = vmatprep.subr.mxu0 0.0
        %v684 = vand.u32 %v191, 4294901760
        %685 = vmatpush1.msra.mxu0 %v684
        %686 = vmatprep.subr.mxu0 0.0
        %v687 = vand.u32 %v192, 4294901760
        %688 = vmatpush1.msra.mxu0 %v687
        %689 = vmatprep.subr.mxu0 0.0
        %v690 = vand.u32 %v193, 4294901760
        %691 = vmatpush1.msra.mxu0 %v690
        %692 = vmatprep.subr.mxu0 0.0
        %v693 = vand.u32 %v194, 4294901760
        %694 = vmatpush1.msra.mxu0 %v693
        %695 = vmatprep.subr.mxu0 0.0
        %v696 = vand.u32 %v195, 4294901760
        %697 = vmatpush1.msra.mxu0 %v696
        %698 = vmatprep.subr.mxu0 0.0
        %v699 = vand.u32 %v196, 4294901760
        %700 = vmatpush1.msra.mxu0 %v699
        %701 = vmatprep.subr.mxu0 0.0
        %v702 = vand.u32 %v197, 4294901760
        %703 = vmatpush1.msra.mxu0 %v702
        %704 = vmatprep.subr.mxu0 0.0
        %705 = vmatpush1.msra.mxu0 0.0
        %706 = vmatprep.subr.mxu0 0.0
        %707 = vmatpush1.msra.mxu0 0.0
        %708 = vmatprep.subr.mxu0 0.0
        %709 = vmatpush1.msra.mxu0 0.0
        %710 = vmatprep.subr.mxu0 0.0
        %711 = vmatpush1.msra.mxu0 0.0
        %712 = vmatprep.subr.mxu0 0.0
        %713 = vmatpush1.msra.mxu0 0.0
        %714 = vmatprep.subr.mxu0 0.0
        %715 = vmatpush1.msra.mxu0 0.0
        %716 = vmatprep.subr.mxu0 0.0
        %717 = vmatpush1.msra.mxu0 0.0
        %718 = vmatprep.subr.mxu0 0.0
        %719 = vmatpush1.msra.mxu0 0.0
        %720 = vmatprep.subr.mxu0 0.0
        %721 = vmatpush1.msra.mxu0 0.0
        %722 = vmatprep.subr.mxu0 0.0
        %723 = vmatpush1.msra.mxu0 0.0
        %724 = vmatprep.subr.mxu0 0.0
        %725 = vmatpush1.msra.mxu0 0.0
        %726 = vmatprep.subr.mxu0 0.0
        %727 = vmatpush1.msra.mxu0 0.0
        %728 = vmatprep.subr.mxu0 0.0
        %729 = vmatpush1.msra.mxu0 0.0
        %730 = vmatprep.subr.mxu0 0.0
        %731 = vmatpush1.msra.mxu0 0.0
        %732 = vmatprep.subr.mxu0 0.0
        %733 = vmatpush1.msra.mxu0 0.0
        %734 = vmatprep.subr.mxu0 0.0
        %735 = vmatpush1.msra.mxu0 0.0
        %736 = vmatprep.subr.mxu0 0.0
        %737 = vmatpush1.msra.mxu0 0.0
        %738 = vmatprep.subr.mxu0 0.0
        %739 = vmatpush1.msra.mxu0 0.0
        %740 = vmatprep.subr.mxu0 0.0
        %741 = vmatpush1.msra.mxu0 0.0
        %742 = vmatprep.subr.mxu0 0.0
        %743 = vmatpush1.msra.mxu0 0.0
        %744 = vmatprep.subr.mxu0 0.0
        %745 = vmatpush1.msra.mxu0 0.0
        %746 = vmatprep.subr.mxu0 0.0
        %747 = vmatpush1.msra.mxu0 0.0
        %748 = vmatprep.subr.mxu0 0.0
        %749 = vmatpush1.msra.mxu0 0.0
        %750 = vmatprep.subr.mxu0 0.0
        %751 = vmatpush1.msra.mxu0 0.0
        %752 = vmatprep.mubr.f32.mxu0 0.0
        %v753 = vand.u32 %v214, 4294901760
        %v754 = vsub.f32 %v214, %v753
        %v755 = vand.u32 %v754, 4294901760
        %756 = vmatmul.mubr.f32.gmra.mrb[0].mxu0 %v755
        %v757 = vpop.f32.mrb[0].mxu0
        %v758 = vadd.f32 %v628, %v757
        %v759 = vpop.f32.mrb[0].mxu0
        %760 = vmatprep.mubr.f32.mxu0 0.0
        %v761 = vand.u32 %v217, 4294901760
        %v762 = vsub.f32 %v217, %v761
        %v763 = vand.u32 %v762, 4294901760
        %764 = vmatmul.mubr.f32.gmra.mrb[0].mxu0 %v763
        %v765 = vpop.f32.mrb[0].mxu0
        %v766 = vadd.f32 %v635, %v765
        %v767 = vpop.f32.mrb[0].mxu0
        %768 = vmatprep.mubr.f32.mxu0 0.0
        %v769 = vand.u32 %v220, 4294901760
        %v770 = vsub.f32 %v220, %v769
        %v771 = vand.u32 %v770, 4294901760
        %772 = vmatmul.mubr.f32.gmra.mrb[0].mxu0 %v771
        %v773 = vpop.f32.mrb[0].mxu0
        %v774 = vadd.f32 %v642, %v773
        %v775 = vpop.f32.mrb[0].mxu0
        %776 = vmatprep.mubr.f32.mxu0 0.0
        %v777 = vand.u32 %v223, 4294901760
        %v778 = vsub.f32 %v223, %v777
        %v779 = vand.u32 %v778, 4294901760
        %780 = vmatmul.mubr.f32.gmra.mrb[0].mxu0 %v779
        %v781 = vpop.f32.mrb[0].mxu0
        %v782 = vadd.f32 %v649, %v781
        %v783 = vpop.f32.mrb[0].mxu0
        %784 = vmatprep.mubr.f32.mxu0 0.0
        %v785 = vand.u32 %v226, 4294901760
        %v786 = vsub.f32 %v226, %v785
        %v787 = vand.u32 %v786, 4294901760
        %788 = vmatmul.mubr.f32.gmra.mrb[0].mxu0 %v787
        %v789 = vpop.f32.mrb[0].mxu0
        %v790 = vadd.f32 %v656, %v789
        %v791 = vpop.f32.mrb[0].mxu0
        %792 = vmatprep.mubr.f32.mxu0 0.0
        %v793 = vand.u32 %v229, 4294901760
        %v794 = vsub.f32 %v229, %v793
        %v795 = vand.u32 %v794, 4294901760
        %796 = vmatmul.mubr.f32.gmra.mrb[0].mxu0 %v795
        %v797 = vpop.f32.mrb[0].mxu0
        %v798 = vadd.f32 %v663, %v797
        %v799 = vpop.f32.mrb[0].mxu0
        %800 = vmatprep.mubr.f32.mxu0 0.0
        %v801 = vand.u32 %v232, 4294901760
        %v802 = vsub.f32 %v232, %v801
        %v803 = vand.u32 %v802, 4294901760
        %804 = vmatmul.mubr.f32.gmra.mrb[0].mxu0 %v803
        %v805 = vpop.f32.mrb[0].mxu0
        %v806 = vadd.f32 %v670, %v805
        %v807 = vpop.f32.mrb[0].mxu0
        %808 = vmatprep.mubr.f32.mxu0 0.0
        %v809 = vand.u32 %v235, 4294901760
        %v810 = vsub.f32 %v235, %v809
        %v811 = vand.u32 %v810, 4294901760
        %812 = vmatmul.mubr.f32.gmra.mrb[0].mxu0 %v811
        %v813 = vpop.f32.mrb[0].mxu0
        %v814 = vadd.f32 %v677, %v813
        %v815 = vpop.f32.mrb[0].mxu0
        %816 = vdwg.mxu0
        %817 = vmatprep.subr.mxu0 0.0
        %v818 = vand.u32 %v190, 4294901760
        %v819 = vsub.f32 %v190, %v818
        %v820 = vand.u32 %v819, 4294901760
        %821 = vmatpush1.msra.mxu0 %v820
        %822 = vmatprep.subr.mxu0 0.0
        %v823 = vand.u32 %v191, 4294901760
        %v824 = vsub.f32 %v191, %v823
        %v825 = vand.u32 %v824, 4294901760
        %826 = vmatpush1.msra.mxu0 %v825
        %827 = vmatprep.subr.mxu0 0.0
        %v828 = vand.u32 %v192, 4294901760
        %v829 = vsub.f32 %v192, %v828
        %v830 = vand.u32 %v829, 4294901760
        %831 = vmatpush1.msra.mxu0 %v830
        %832 = vmatprep.subr.mxu0 0.0
        %v833 = vand.u32 %v193, 4294901760
        %v834 = vsub.f32 %v193, %v833
        %v835 = vand.u32 %v834, 4294901760
        %836 = vmatpush1.msra.mxu0 %v835
        %837 = vmatprep.subr.mxu0 0.0
        %v838 = vand.u32 %v194, 4294901760
        %v839 = vsub.f32 %v194, %v838
        %v840 = vand.u32 %v839, 4294901760
        %841 = vmatpush1.msra.mxu0 %v840
        %842 = vmatprep.subr.mxu0 0.0
        %v843 = vand.u32 %v195, 4294901760
        %v844 = vsub.f32 %v195, %v843
        %v845 = vand.u32 %v844, 4294901760
        %846 = vmatpush1.msra.mxu0 %v845
        %847 = vmatprep.subr.mxu0 0.0
        %v848 = vand.u32 %v196, 4294901760
        %v849 = vsub.f32 %v196, %v848
        %v850 = vand.u32 %v849, 4294901760
        %851 = vmatpush1.msra.mxu0 %v850
        %852 = vmatprep.subr.mxu0 0.0
        %v853 = vand.u32 %v197, 4294901760
        %v854 = vsub.f32 %v197, %v853
        %v855 = vand.u32 %v854, 4294901760
        %856 = vmatpush1.msra.mxu0 %v855
        %857 = vmatprep.subr.mxu0 0.0
        %858 = vmatpush1.msra.mxu0 0.0
        %859 = vmatprep.subr.mxu0 0.0
        %860 = vmatpush1.msra.mxu0 0.0
        %861 = vmatprep.subr.mxu0 0.0
        %862 = vmatpush1.msra.mxu0 0.0
        %863 = vmatprep.subr.mxu0 0.0
        %864 = vmatpush1.msra.mxu0 0.0
        %865 = vmatprep.subr.mxu0 0.0
        %866 = vmatpush1.msra.mxu0 0.0
        %867 = vmatprep.subr.mxu0 0.0
        %868 = vmatpush1.msra.mxu0 0.0
        %869 = vmatprep.subr.mxu0 0.0
        %870 = vmatpush1.msra.mxu0 0.0
        %871 = vmatprep.subr.mxu0 0.0
        %872 = vmatpush1.msra.mxu0 0.0
        %873 = vmatprep.subr.mxu0 0.0
        %874 = vmatpush1.msra.mxu0 0.0
        %875 = vmatprep.subr.mxu0 0.0
        %876 = vmatpush1.msra.mxu0 0.0
        %877 = vmatprep.subr.mxu0 0.0
        %878 = vmatpush1.msra.mxu0 0.0
        %879 = vmatprep.subr.mxu0 0.0
        %880 = vmatpush1.msra.mxu0 0.0
        %881 = vmatprep.subr.mxu0 0.0
        %882 = vmatpush1.msra.mxu0 0.0
        %883 = vmatprep.subr.mxu0 0.0
        %884 = vmatpush1.msra.mxu0 0.0
        %885 = vmatprep.subr.mxu0 0.0
        %886 = vmatpush1.msra.mxu0 0.0
        %887 = vmatprep.subr.mxu0 0.0
        %888 = vmatpush1.msra.mxu0 0.0
        %889 = vmatprep.subr.mxu0 0.0
        %890 = vmatpush1.msra.mxu0 0.0
        %891 = vmatprep.subr.mxu0 0.0
        %892 = vmatpush1.msra.mxu0 0.0
        %893 = vmatprep.subr.mxu0 0.0
        %894 = vmatpush1.msra.mxu0 0.0
        %895 = vmatprep.subr.mxu0 0.0
        %896 = vmatpush1.msra.mxu0 0.0
        %897 = vmatprep.subr.mxu0 0.0
        %898 = vmatpush1.msra.mxu0 0.0
        %899 = vmatprep.subr.mxu0 0.0
        %900 = vmatpush1.msra.mxu0 0.0
        %901 = vmatprep.subr.mxu0 0.0
        %902 = vmatpush1.msra.mxu0 0.0
        %903 = vmatprep.subr.mxu0 0.0
        %904 = vmatpush1.msra.mxu0 0.0
        %905 = vmatprep.mubr.f32.mxu0 0.0
        %v906 = vand.u32 %v214, 4294901760
        %907 = vmatmul.mubr.f32.gmra.mrb[0].mxu0 %v906
        %v908 = vpop.f32.mrb[0].mxu0
        %v909 = vadd.f32 %v758, %v908
        %v910 = vpop.f32.mrb[0].mxu0
        %911 = vmatprep.mubr.f32.mxu0 0.0
        %v912 = vand.u32 %v217, 4294901760
        %913 = vmatmul.mubr.f32.gmra.mrb[0].mxu0 %v912
        %v914 = vpop.f32.mrb[0].mxu0
        %v915 = vadd.f32 %v766, %v914
        %v916 = vpop.f32.mrb[0].mxu0
        %917 = vmatprep.mubr.f32.mxu0 0.0
        %v918 = vand.u32 %v220, 4294901760
        %919 = vmatmul.mubr.f32.gmra.mrb[0].mxu0 %v918
        %v920 = vpop.f32.mrb[0].mxu0
        %v921 = vadd.f32 %v774, %v920
        %v922 = vpop.f32.mrb[0].mxu0
        %923 = vmatprep.mubr.f32.mxu0 0.0
        %v924 = vand.u32 %v223, 4294901760
        %925 = vmatmul.mubr.f32.gmra.mrb[0].mxu0 %v924
        %v926 = vpop.f32.mrb[0].mxu0
        %v927 = vadd.f32 %v782, %v926
        %v928 = vpop.f32.mrb[0].mxu0
        %929 = vmatprep.mubr.f32.mxu0 0.0
        %v930 = vand.u32 %v226, 4294901760
        %931 = vmatmul.mubr.f32.gmra.mrb[0].mxu0 %v930
        %v932 = vpop.f32.mrb[0].mxu0
        %v933 = vadd.f32 %v790, %v932
        %v934 = vpop.f32.mrb[0].mxu0
        %935 = vmatprep.mubr.f32.mxu0 0.0
        %v936 = vand.u32 %v229, 4294901760
        %937 = vmatmul.mubr.f32.gmra.mrb[0].mxu0 %v936
        %v938 = vpop.f32.mrb[0].mxu0
        %v939 = vadd.f32 %v798, %v938
        %v940 = vpop.f32.mrb[0].mxu0
        %941 = vmatprep.mubr.f32.mxu0 0.0
        %v942 = vand.u32 %v232, 4294901760
        %943 = vmatmul.mubr.f32.gmra.mrb[0].mxu0 %v942
        %v944 = vpop.f32.mrb[0].mxu0
        %v945 = vadd.f32 %v806, %v944
        %v946 = vpop.f32.mrb[0].mxu0
        %947 = vmatprep.mubr.f32.mxu0 0.0
        %v948 = vand.u32 %v235, 4294901760
        %949 = vmatmul.mubr.f32.gmra.mrb[0].mxu0 %v948
        %v950 = vpop.f32.mrb[0].mxu0
        %v951 = vadd.f32 %v814, %v950
        %v952 = vpop.f32.mrb[0].mxu0
        %953 = vdwg.mxu0
        %954 = vmatprep.subr.mxu0 0.0
        %v955 = vand.u32 %v190, 4294901760
        %956 = vmatpush1.msra.mxu0 %v955
        %957 = vmatprep.subr.mxu0 0.0
        %v958 = vand.u32 %v191, 4294901760
        %959 = vmatpush1.msra.mxu0 %v958
        %960 = vmatprep.subr.mxu0 0.0
        %v961 = vand.u32 %v192, 4294901760
        %962 = vmatpush1.msra.mxu0 %v961
        %963 = vmatprep.subr.mxu0 0.0
        %v964 = vand.u32 %v193, 4294901760
        %965 = vmatpush1.msra.mxu0 %v964
        %966 = vmatprep.subr.mxu0 0.0
        %v967 = vand.u32 %v194, 4294901760
        %968 = vmatpush1.msra.mxu0 %v967
        %969 = vmatprep.subr.mxu0 0.0
        %v970 = vand.u32 %v195, 4294901760
        %971 = vmatpush1.msra.mxu0 %v970
        %972 = vmatprep.subr.mxu0 0.0
        %v973 = vand.u32 %v196, 4294901760
        %974 = vmatpush1.msra.mxu0 %v973
        %975 = vmatprep.subr.mxu0 0.0
        %v976 = vand.u32 %v197, 4294901760
        %977 = vmatpush1.msra.mxu0 %v976
        %978 = vmatprep.subr.mxu0 0.0
        %979 = vmatpush1.msra.mxu0 0.0
        %980 = vmatprep.subr.mxu0 0.0
        %981 = vmatpush1.msra.mxu0 0.0
        %982 = vmatprep.subr.mxu0 0.0
        %983 = vmatpush1.msra.mxu0 0.0
        %984 = vmatprep.subr.mxu0 0.0
        %985 = vmatpush1.msra.mxu0 0.0
        %986 = vmatprep.subr.mxu0 0.0
        %987 = vmatpush1.msra.mxu0 0.0
        %988 = vmatprep.subr.mxu0 0.0
        %989 = vmatpush1.msra.mxu0 0.0
        %990 = vmatprep.subr.mxu0 0.0
        %991 = vmatpush1.msra.mxu0 0.0
        %992 = vmatprep.subr.mxu0 0.0
        %993 = vmatpush1.msra.mxu0 0.0
        %994 = vmatprep.subr.mxu0 0.0
        %995 = vmatpush1.msra.mxu0 0.0
        %996 = vmatprep.subr.mxu0 0.0
        %997 = vmatpush1.msra.mxu0 0.0
        %998 = vmatprep.subr.mxu0 0.0
        %999 = vmatpush1.msra.mxu0 0.0
        %1000 = vmatprep.subr.mxu0 0.0
        %1001 = vmatpush1.msra.mxu0 0.0
        %1002 = vmatprep.subr.mxu0 0.0
        %1003 = vmatpush1.msra.mxu0 0.0
        %1004 = vmatprep.subr.mxu0 0.0
        %1005 = vmatpush1.msra.mxu0 0.0
        %1006 = vmatprep.subr.mxu0 0.0
        %1007 = vmatpush1.msra.mxu0 0.0
        %1008 = vmatprep.subr.mxu0 0.0
        %1009 = vmatpush1.msra.mxu0 0.0
        %1010 = vmatprep.subr.mxu0 0.0
        %1011 = vmatpush1.msra.mxu0 0.0
        %1012 = vmatprep.subr.mxu0 0.0
        %1013 = vmatpush1.msra.mxu0 0.0
        %1014 = vmatprep.subr.mxu0 0.0
        %1015 = vmatpush1.msra.mxu0 0.0
        %1016 = vmatprep.subr.mxu0 0.0
        %1017 = vmatpush1.msra.mxu0 0.0
        %1018 = vmatprep.subr.mxu0 0.0
        %1019 = vmatpush1.msra.mxu0 0.0
        %1020 = vmatprep.subr.mxu0 0.0
        %1021 = vmatpush1.msra.mxu0 0.0
        %1022 = vmatprep.subr.mxu0 0.0
        %1023 = vmatpush1.msra.mxu0 0.0
        %1024 = vmatprep.subr.mxu0 0.0
        %1025 = vmatpush1.msra.mxu0 0.0
        %1026 = vmatprep.mubr.f32.mxu0 0.0
        %v1027 = vand.u32 %v214, 4294901760
        %1028 = vmatmul.mubr.f32.gmra.mrb[0].mxu0 %v1027
        %v1029 = vpop.f32.mrb[0].mxu0
        %v1030 = vadd.f32 %v909, %v1029
        %v1031 = vpop.f32.mrb[0].mxu0
        %1032 = vmatprep.mubr.f32.mxu0 0.0
        %v1033 = vand.u32 %v217, 4294901760
        %1034 = vmatmul.mubr.f32.gmra.mrb[0].mxu0 %v1033
        %v1035 = vpop.f32.mrb[0].mxu0
        %v1036 = vadd.f32 %v915, %v1035
        %v1037 = vpop.f32.mrb[0].mxu0
        %1038 = vmatprep.mubr.f32.mxu0 0.0
        %v1039 = vand.u32 %v220, 4294901760
        %1040 = vmatmul.mubr.f32.gmra.mrb[0].mxu0 %v1039
        %v1041 = vpop.f32.mrb[0].mxu0
        %v1042 = vadd.f32 %v921, %v1041
        %v1043 = vpop.f32.mrb[0].mxu0
        %1044 = vmatprep.mubr.f32.mxu0 0.0
        %v1045 = vand.u32 %v223, 4294901760
        %1046 = vmatmul.mubr.f32.gmra.mrb[0].mxu0 %v1045
        %v1047 = vpop.f32.mrb[0].mxu0
        %v1048 = vadd.f32 %v927, %v1047
        %v1049 = vpop.f32.mrb[0].mxu0
        %1050 = vmatprep.mubr.f32.mxu0 0.0
        %v1051 = vand.u32 %v226, 4294901760
        %1052 = vmatmul.mubr.f32.gmra.mrb[0].mxu0 %v1051
        %v1053 = vpop.f32.mrb[0].mxu0
        %v1054 = vadd.f32 %v933, %v1053
        %v1055 = vpop.f32.mrb[0].mxu0
        %1056 = vmatprep.mubr.f32.mxu0 0.0
        %v1057 = vand.u32 %v229, 4294901760
        %1058 = vmatmul.mubr.f32.gmra.mrb[0].mxu0 %v1057
        %v1059 = vpop.f32.mrb[0].mxu0
        %v1060 = vadd.f32 %v939, %v1059
        %v1061 = vpop.f32.mrb[0].mxu0
        %1062 = vmatprep.mubr.f32.mxu0 0.0
        %v1063 = vand.u32 %v232, 4294901760
        %1064 = vmatmul.mubr.f32.gmra.mrb[0].mxu0 %v1063
        %v1065 = vpop.f32.mrb[0].mxu0
        %v1066 = vadd.f32 %v945, %v1065
        %v1067 = vpop.f32.mrb[0].mxu0
        %1068 = vmatprep.mubr.f32.mxu0 0.0
        %v1069 = vand.u32 %v235, 4294901760
        %1070 = vmatmul.mubr.f32.gmra.mrb[0].mxu0 %v1069
        %v1071 = vpop.f32.mrb[0].mxu0
        %v1072 = vadd.f32 %v951, %v1071
        %v1073 = vpop.f32.mrb[0].mxu0
        %1074 = vdwg.mxu0
        %v1075 = vmax.f32 %v1030, 0.0
        %v1076 = vmax.f32 %v1036, 0.0
        %v1077 = vmax.f32 %v1042, 0.0
        %v1078 = vmax.f32 %v1048, 0.0
        %v1079 = vmax.f32 %v1054, 0.0
        %v1080 = vmax.f32 %v1060, 0.0
        %v1081 = vmax.f32 %v1066, 0.0
        %v1082 = vmax.f32 %v1072, 0.0
        %v1083 = vlaneseq
        %v1084 = vshrl.u32 %v1083, 7
        %v1085 = vsub.s32 0, %v1084
        %v1086 = vrot.slane %v199, %v1085
        %v1087 = vmul.f32 %v1075, %v1086
        %v1088 = vmul.f32 %v1076, %v1086
        %v1089 = vmul.f32 %v1077, %v1086
        %v1090 = vmul.f32 %v1078, %v1086
        %v1091 = vmul.f32 %v1079, %v1086
        %v1092 = vmul.f32 %v1080, %v1086
        %v1093 = vmul.f32 %v1081, %v1086
        %v1094 = vmul.f32 %v1082, %v1086
        %vm1095 = vcmask 261120
        %v1096 = vsel %vm1095, %v1087, 0.0
        %1097 = vadd.xlane.f32.xlu0 %v1096
        %v1098 = vpop.xlane.xlu0 %1097
        %v1099 = vsel %vm1095, %v1088, 0.0
        %1100 = vadd.xlane.f32.xlu0 %v1099
        %v1101 = vpop.xlane.xlu0 %1100
        %v1102 = vsel %vm1095, %v1089, 0.0
        %1103 = vadd.xlane.f32.xlu0 %v1102
        %v1104 = vpop.xlane.xlu0 %1103
        %v1105 = vsel %vm1095, %v1090, 0.0
        %1106 = vadd.xlane.f32.xlu0 %v1105
        %v1107 = vpop.xlane.xlu0 %1106
        %v1108 = vsel %vm1095, %v1091, 0.0
        %1109 = vadd.xlane.f32.xlu0 %v1108
        %v1110 = vpop.xlane.xlu0 %1109
        %v1111 = vsel %vm1095, %v1092, 0.0
        %1112 = vadd.xlane.f32.xlu0 %v1111
        %v1113 = vpop.xlane.xlu0 %1112
        %v1114 = vsel %vm1095, %v1093, 0.0
        %1115 = vadd.xlane.f32.xlu0 %v1114
        %v1116 = vpop.xlane.xlu0 %1115
        %v1117 = vsel %vm1095, %v1094, 0.0
        %1118 = vadd.xlane.f32.xlu0 %v1117
        %v1119 = vpop.xlane.xlu0 %1118
        %v1128 = vlaneseq
        %v1129 = vand.u32 %v1128, 127
        %v1130 = vlaneseq
        %v1131 = vshrl.u32 %v1130, 7
        %v1132 = vsub.s32 %v1129, %v1131
        %v1133 = vrot.slane %v1098, %v1132
        %v1134 = vlaneseq
        %v1135 = vshrl.u32 %v1134, 7
        %v1136 = vsub.s32 %v1129, %v1135
        %v1137 = vrot.slane %v1101, %v1136
        %v1138 = vlaneseq
        %v1139 = vshrl.u32 %v1138, 7
        %v1140 = vsub.s32 %v1129, %v1139
        %v1141 = vrot.slane %v1104, %v1140
        %v1142 = vlaneseq
        %v1143 = vshrl.u32 %v1142, 7
        %v1144 = vsub.s32 %v1129, %v1143
        %v1145 = vrot.slane %v1107, %v1144
        %v1146 = vlaneseq
        %v1147 = vshrl.u32 %v1146, 7
        %v1148 = vsub.s32 %v1129, %v1147
        %v1149 = vrot.slane %v1110, %v1148
        %v1150 = vlaneseq
        %v1151 = vshrl.u32 %v1150, 7
        %v1152 = vsub.s32 %v1129, %v1151
        %v1153 = vrot.slane %v1113, %v1152
        %v1154 = vlaneseq
        %v1155 = vshrl.u32 %v1154, 7
        %v1156 = vsub.s32 %v1129, %v1155
        %v1157 = vrot.slane %v1116, %v1156
        %v1158 = vlaneseq
        %v1159 = vshrl.u32 %v1158, 7
        %v1160 = vsub.s32 %v1129, %v1159
        %v1161 = vrot.slane %v1119, %v1160
        %vm1162 = vcmask 1041409
        %v1163 = vsel %vm1162, %v1137, %v1133
        %vm1164 = vcmask 1042434
        %v1165 = vsel %vm1164, %v1141, %v1163
        %vm1166 = vcmask 1043459
        %v1167 = vsel %vm1166, %v1145, %v1165
        %vm1168 = vcmask 1044484
        %v1169 = vsel %vm1168, %v1149, %v1167
        %vm1170 = vcmask 1045509
        %v1171 = vsel %vm1170, %v1153, %v1169
        %vm1172 = vcmask 1046534
        %v1173 = vsel %vm1172, %v1157, %v1171
        %vm1174 = vcmask 1047559
        %v1175 = vsel %vm1174, %v1161, %v1173
        %vm1177 = vcmask 64512
        %v1178 = vsel %vm1177, %v1175, -inf
        %1179 = vmax.xlane.f32.xlu0 %v1178
        %v1180 = vpop.xlane.xlu0 %1179
        %v1182 = vlaneseq
        %v1183 = vshrl.u32 %v1182, 7
        %v1184 = vsub.s32 0, %v1183
        %v1185 = vrot.slane %v1180, %v1184
        %v1186 = vlaneseq
        %v1187 = vshrl.u32 %v1186, 7
        %v1188 = vsub.s32 1, %v1187
        %v1189 = vrot.slane %v1180, %v1188
        %v1190 = vlaneseq
        %v1191 = vshrl.u32 %v1190, 7
        %v1192 = vsub.s32 2, %v1191
        %v1193 = vrot.slane %v1180, %v1192
        %v1194 = vlaneseq
        %v1195 = vshrl.u32 %v1194, 7
        %v1196 = vsub.s32 3, %v1195
        %v1197 = vrot.slane %v1180, %v1196
        %v1198 = vlaneseq
        %v1199 = vshrl.u32 %v1198, 7
        %v1200 = vsub.s32 4, %v1199
        %v1201 = vrot.slane %v1180, %v1200
        %v1202 = vlaneseq
        %v1203 = vshrl.u32 %v1202, 7
        %v1204 = vsub.s32 5, %v1203
        %v1205 = vrot.slane %v1180, %v1204
        %v1206 = vlaneseq
        %v1207 = vshrl.u32 %v1206, 7
        %v1208 = vsub.s32 6, %v1207
        %v1209 = vrot.slane %v1180, %v1208
        %v1210 = vlaneseq
        %v1211 = vshrl.u32 %v1210, 7
        %v1212 = vsub.s32 7, %v1211
        %v1213 = vrot.slane %v1180, %v1212
        %v1222 = vsub.f32 %v1098, %v1185
        %v1223 = vsub.f32 %v1101, %v1189
        %v1224 = vsub.f32 %v1104, %v1193
        %v1225 = vsub.f32 %v1107, %v1197
        %v1226 = vsub.f32 %v1110, %v1201
        %v1227 = vsub.f32 %v1113, %v1205
        %v1228 = vsub.f32 %v1116, %v1209
        %v1229 = vsub.f32 %v1119, %v1213
        %v1230 = vmul.f32 %v1222, 1.442695
        %v1231 = vpow.pop %v1230
        %v1232 = vmul.f32 %v1223, 1.442695
        %v1233 = vpow.pop %v1232
        %v1234 = vmul.f32 %v1224, 1.442695
        %v1235 = vpow.pop %v1234
        %v1236 = vmul.f32 %v1225, 1.442695
        %v1237 = vpow.pop %v1236
        %v1238 = vmul.f32 %v1226, 1.442695
        %v1239 = vpow.pop %v1238
        %v1240 = vmul.f32 %v1227, 1.442695
        %v1241 = vpow.pop %v1240
        %v1242 = vmul.f32 %v1228, 1.442695
        %v1243 = vpow.pop %v1242
        %v1244 = vmul.f32 %v1229, 1.442695
        %v1245 = vpow.pop %v1244
        %1254 = vset.pattern.permute.xlu0 0
        %1255 = vperm.xlu0 %1254, %v1231
        %v1256 = vpop.permute.xlu0 %1255
        %1257 = vset.pattern.permute.xlu0 0
        %1258 = vperm.xlu0 %1257, %v1233
        %v1259 = vpop.permute.xlu0 %1258
        %1260 = vset.pattern.permute.xlu0 0
        %1261 = vperm.xlu0 %1260, %v1235
        %v1262 = vpop.permute.xlu0 %1261
        %1263 = vset.pattern.permute.xlu0 0
        %1264 = vperm.xlu0 %1263, %v1237
        %v1265 = vpop.permute.xlu0 %1264
        %1266 = vset.pattern.permute.xlu0 0
        %1267 = vperm.xlu0 %1266, %v1239
        %v1268 = vpop.permute.xlu0 %1267
        %1269 = vset.pattern.permute.xlu0 0
        %1270 = vperm.xlu0 %1269, %v1241
        %v1271 = vpop.permute.xlu0 %1270
        %1272 = vset.pattern.permute.xlu0 0
        %1273 = vperm.xlu0 %1272, %v1243
        %v1274 = vpop.permute.xlu0 %1273
        %1275 = vset.pattern.permute.xlu0 0
        %1276 = vperm.xlu0 %1275, %v1245
        %v1277 = vpop.permute.xlu0 %1276
        %v1278 = vlaneseq
        %v1279 = vshrl.u32 %v1278, 7
        %v1280 = vsub.s32 %v1129, %v1279
        %v1281 = vrot.slane %v1256, %v1280
        %v1282 = vlaneseq
        %v1283 = vshrl.u32 %v1282, 7
        %v1284 = vsub.s32 %v1129, %v1283
        %v1285 = vrot.slane %v1259, %v1284
        %v1286 = vlaneseq
        %v1287 = vshrl.u32 %v1286, 7
        %v1288 = vsub.s32 %v1129, %v1287
        %v1289 = vrot.slane %v1262, %v1288
        %v1290 = vlaneseq
        %v1291 = vshrl.u32 %v1290, 7
        %v1292 = vsub.s32 %v1129, %v1291
        %v1293 = vrot.slane %v1265, %v1292
        %v1294 = vlaneseq
        %v1295 = vshrl.u32 %v1294, 7
        %v1296 = vsub.s32 %v1129, %v1295
        %v1297 = vrot.slane %v1268, %v1296
        %v1298 = vlaneseq
        %v1299 = vshrl.u32 %v1298, 7
        %v1300 = vsub.s32 %v1129, %v1299
        %v1301 = vrot.slane %v1271, %v1300
        %v1302 = vlaneseq
        %v1303 = vshrl.u32 %v1302, 7
        %v1304 = vsub.s32 %v1129, %v1303
        %v1305 = vrot.slane %v1274, %v1304
        %v1306 = vlaneseq
        %v1307 = vshrl.u32 %v1306, 7
        %v1308 = vsub.s32 %v1129, %v1307
        %v1309 = vrot.slane %v1277, %v1308
        %v1310 = vsel %vm1162, %v1285, %v1281
        %v1311 = vsel %vm1164, %v1289, %v1310
        %v1312 = vsel %vm1166, %v1293, %v1311
        %v1313 = vsel %vm1168, %v1297, %v1312
        %v1314 = vsel %vm1170, %v1301, %v1313
        %v1315 = vsel %vm1172, %v1305, %v1314
        %v1316 = vsel %vm1174, %v1309, %v1315
        %v1318 = vsel %vm1177, %v1316, 0.0
        %1319 = vadd.xlane.f32.xlu0 %v1318
        %v1320 = vpop.xlane.xlu0 %1319
        %v1321 = vrcp.pop %v1320
        %v1323 = vlaneseq
        %v1324 = vshrl.u32 %v1323, 7
        %v1325 = vsub.s32 0, %v1324
        %v1326 = vrot.slane %v1321, %v1325
        %v1327 = vlaneseq
        %v1328 = vshrl.u32 %v1327, 7
        %v1329 = vsub.s32 1, %v1328
        %v1330 = vrot.slane %v1321, %v1329
        %v1331 = vlaneseq
        %v1332 = vshrl.u32 %v1331, 7
        %v1333 = vsub.s32 2, %v1332
        %v1334 = vrot.slane %v1321, %v1333
        %v1335 = vlaneseq
        %v1336 = vshrl.u32 %v1335, 7
        %v1337 = vsub.s32 3, %v1336
        %v1338 = vrot.slane %v1321, %v1337
        %v1339 = vlaneseq
        %v1340 = vshrl.u32 %v1339, 7
        %v1341 = vsub.s32 4, %v1340
        %v1342 = vrot.slane %v1321, %v1341
        %v1343 = vlaneseq
        %v1344 = vshrl.u32 %v1343, 7
        %v1345 = vsub.s32 5, %v1344
        %v1346 = vrot.slane %v1321, %v1345
        %v1347 = vlaneseq
        %v1348 = vshrl.u32 %v1347, 7
        %v1349 = vsub.s32 6, %v1348
        %v1350 = vrot.slane %v1321, %v1349
        %v1351 = vlaneseq
        %v1352 = vshrl.u32 %v1351, 7
        %v1353 = vsub.s32 7, %v1352
        %v1354 = vrot.slane %v1321, %v1353
        %v1363 = vmul.f32 %v1231, %v1326
        %v1364 = vmul.f32 %v1233, %v1330
        %v1365 = vmul.f32 %v1235, %v1334
        %v1366 = vmul.f32 %v1237, %v1338
        %v1367 = vmul.f32 %v1239, %v1342
        %v1368 = vmul.f32 %v1241, %v1346
        %v1369 = vmul.f32 %v1243, %v1350
        %v1370 = vmul.f32 %v1245, %v1354
        %1379 = vset.pattern.permute.xlu0 0
        %1380 = vperm.xlu0 %1379, %v1363
        %v1381 = vpop.permute.xlu0 %1380
        %1382 = vset.pattern.permute.xlu0 0
        %1383 = vperm.xlu0 %1382, %v1364
        %v1384 = vpop.permute.xlu0 %1383
        %1385 = vset.pattern.permute.xlu0 0
        %1386 = vperm.xlu0 %1385, %v1365
        %v1387 = vpop.permute.xlu0 %1386
        %1388 = vset.pattern.permute.xlu0 0
        %1389 = vperm.xlu0 %1388, %v1366
        %v1390 = vpop.permute.xlu0 %1389
        %1391 = vset.pattern.permute.xlu0 0
        %1392 = vperm.xlu0 %1391, %v1367
        %v1393 = vpop.permute.xlu0 %1392
        %1394 = vset.pattern.permute.xlu0 0
        %1395 = vperm.xlu0 %1394, %v1368
        %v1396 = vpop.permute.xlu0 %1395
        %1397 = vset.pattern.permute.xlu0 0
        %1398 = vperm.xlu0 %1397, %v1369
        %v1399 = vpop.permute.xlu0 %1398
        %1400 = vset.pattern.permute.xlu0 0
        %1401 = vperm.xlu0 %1400, %v1370
        %v1402 = vpop.permute.xlu0 %1401
        %v1403 = vlaneseq
        %v1404 = vshrl.u32 %v1403, 7
        %v1405 = vsub.s32 %v1129, %v1404
        %v1406 = vrot.slane %v1381, %v1405
        %v1407 = vlaneseq
        %v1408 = vshrl.u32 %v1407, 7
        %v1409 = vsub.s32 %v1129, %v1408
        %v1410 = vrot.slane %v1384, %v1409
        %v1411 = vlaneseq
        %v1412 = vshrl.u32 %v1411, 7
        %v1413 = vsub.s32 %v1129, %v1412
        %v1414 = vrot.slane %v1387, %v1413
        %v1415 = vlaneseq
        %v1416 = vshrl.u32 %v1415, 7
        %v1417 = vsub.s32 %v1129, %v1416
        %v1418 = vrot.slane %v1390, %v1417
        %v1419 = vlaneseq
        %v1420 = vshrl.u32 %v1419, 7
        %v1421 = vsub.s32 %v1129, %v1420
        %v1422 = vrot.slane %v1393, %v1421
        %v1423 = vlaneseq
        %v1424 = vshrl.u32 %v1423, 7
        %v1425 = vsub.s32 %v1129, %v1424
        %v1426 = vrot.slane %v1396, %v1425
        %v1427 = vlaneseq
        %v1428 = vshrl.u32 %v1427, 7
        %v1429 = vsub.s32 %v1129, %v1428
        %v1430 = vrot.slane %v1399, %v1429
        %v1431 = vlaneseq
        %v1432 = vshrl.u32 %v1431, 7
        %v1433 = vsub.s32 %v1129, %v1432
        %v1434 = vrot.slane %v1402, %v1433
        %v1435 = vsel %vm1162, %v1410, %v1406
        %v1436 = vsel %vm1164, %v1414, %v1435
        %v1437 = vsel %vm1166, %v1418, %v1436
        %v1438 = vsel %vm1168, %v1422, %v1437
        %v1439 = vsel %vm1170, %v1426, %v1438
        %v1440 = vsel %vm1172, %v1430, %v1439
        %v1441 = vsel %vm1174, %v1434, %v1440
        %1443 = vst.msk [vmem:[%s189] sm:$0xff] %vm1177, %v1441
        %p1444 = scmp.lt.s32.totalorder %s17, 1
        %s1445 = scalar_select %p1444, %s17, 1
        %s1446 = smul.addr %s1445, 8
        %s1447 = scalar_lea.vmem %s3, %s1446
        // Predicated region
        $region37: #{tpu_custom_call.1} parent=31 // pred_check
          %p1448 = pneg %p103
        $region38: #{tpu_custom_call.1} parent=31 // pred_check_branch
          %1450 = sbr.rel (%p1448) target = $region40
        $region39: #{tpu_custom_call.1} parent=31 // pred_region
          _
        $region40: #{tpu_custom_call.1} parent=31 // pred_fallthru
          _
      $region32: #{tpu_custom_call.1} parent=5 // pred_fallthru
        _
      %p1451 = scmp.le.s32.totalorder 2, %s12
      // Predicated region
      $region41: #{tpu_custom_call.1} parent=5 // pred_check
        %p1452 = pneg %p1451
      $region42: #{tpu_custom_call.1} parent=5 // pred_check_branch
        %1454 = sbr.rel (%p1452) target = $region44
      $region43: #{tpu_custom_call.1} parent=5 // pred_region
        %s1455 = ssub.s32 %s12, 2
        // Predicated region
        $region45: #{tpu_custom_call.1} parent=43 // pred_check
          %p1456 = pneg %p109
        $region46: #{tpu_custom_call.1} parent=43 // pred_check_branch
          %1458 = sbr.rel (%p1456) target = $region48
        $region47: #{tpu_custom_call.1} parent=43 // pred_region
          %p1459 = scmp.lt.s32.totalorder %s18, 1
          %s1460 = scalar_select %p1459, %s18, 1
          %s1461 = smul.addr %s1460, 8
          %s1462 = scalar_lea.vmem %s3, %s1461
        $region48: #{tpu_custom_call.1} parent=43 // pred_fallthru
          _
      $region44: #{tpu_custom_call.1} parent=5 // pred_fallthru
        _
    $region6: #{tpu_custom_call.1} parent=1 // loop_footer
      %s16 = sadd.s32 1, %s12
    $region7: #{tpu_custom_call.1} parent=1 // loop_footer_branch
      %11 = sbr.rel target = $region3
    $region8: #{tpu_custom_call.1} parent=1 // loop_exit
      _
    %1463 = vsyncpa [#allocation3], 1
    %s1464 = scalar_lea.sflag [#allocation3], 1
    %1465 = vsyncpa %s1464, 1

</llo_original>
